<compile_context>
chip_gen: v6e
topology: v6e:2x2x1
jax: 0.10.0
libtpu: 0.0.40
codegen_flags: <defaults>
</compile_context>

<pallas_src>
import functools

import jax
import jax.numpy as jnp
from jax.experimental import pallas as pl
from jax.experimental.pallas import tpu as pltpu


# ----------------------------- kernels ------------------------------------ #

def _stats_kernel(x_ref, w_ref, sum_ref, ssq_ref, *, mf_full):
    """Phase 1: per-tile centered partial stats of y = x_fold @ W_blk (no bias).

    Folded rows with index >= mf_full (zero padding and/or the ragged last grid
    block, whose trailing rows contain stale VMEM) are masked out so the
    centered statistics stay exact.
    """
    tmf = x_ref.shape[0]
    y = jnp.dot(x_ref[...], w_ref[...],
                preferred_element_type=jnp.float32)            # (TMF, F*C_out) f32

    start = pl.program_id(0) * tmf
    row = jax.lax.broadcasted_iota(jnp.int32, y.shape, 0) + start
    valid = row < mf_full                                       # (TMF, F*C_out) bool
    cnt = jnp.clip(mf_full - start, 0, tmf).astype(jnp.float32)  # scalar: valid rows

    yv = jnp.where(valid, y, 0.0)
    s = jnp.sum(yv, axis=0, keepdims=True)                      # (1, F*C_out)
    mu = s / jnp.maximum(cnt, 1.0)                              # per-lane tile mean
    d = jnp.where(valid, y - mu, 0.0)
    ssq = jnp.sum(d * d, axis=0, keepdims=True)                 # centered sum of squares

    sum_ref[...] = s[None]                                      # (1, 1, F*C_out)
    ssq_ref[...] = ssq[None]


def _apply_kernel(x_ref, w_ref, scale_ref, shift_ref, o_ref, *,
                  no_relu: bool, negative_slope: float):
    """Phase 2: y = (x_fold @ W_blk) * scale + shift, optional LeakyReLU, store.

    Ragged last block: out-of-range rows compute garbage, but their stores are
    bounds-masked by Pallas; no in-kernel masking needed.
    """
    y = jnp.dot(x_ref[...], w_ref[...], preferred_element_type=jnp.float32)
    y = y * scale_ref[...] + shift_ref[...]
    if not no_relu:
        y = jnp.where(y > 0, y, negative_slope * y)
    o_ref[...] = y.astype(o_ref.dtype)


# ----------------------------- helpers ------------------------------------ #

def _cdiv(a, b):
    return -(-a // b)


def _fold_factor(c_in):
    """How many logical rows to fold into the lane dimension."""
    if c_in >= 128:
        return 1
    if 128 % c_in == 0:
        return 128 // c_in        # folded input width == 128 lanes exactly
    return 8


def _pick_fold_tile(mf, fw_in, fw_out, in_isz, out_isz, tmf=None,
                    budget_bytes=10 << 20, cap=4096):
    """Pick folded-row tile size.

    Corrected VMEM accounting: with 128/256-wide last dims there is no lane
    padding, so the double-buffered working set is 2*(fw_in*isz_in + fw_out*isz_out)
    bytes per folded row.  Budget 10 MiB keeps us under v5e's 16 MiB default
    scoped VMEM (and v7x's smaller per-TC VMEM) without touching vmem_limit_bytes.
    """
    align = 8 if min(in_isz, out_isz) >= 4 else 16   # sublane pack (f32 / sub-32-bit)
    if tmf is None:
        per_row = 2 * (fw_in * in_isz + fw_out * out_isz)
        tmf = max(align, min(cap, (budget_bytes // per_row) // align * align))
        if tmf < mf:
            nt = _cdiv(mf, tmf)
            if nt % 2:  # v7x megacore: prefer an even tile count on the parallel axis
                cand = _cdiv(_cdiv(mf, nt + 1), align) * align
                if cand >= align and _cdiv(mf, cand) % 2 == 0:
                    tmf = cand
    else:
        tmf = max(align, (tmf // align) * align)
    tmf = min(tmf, mf)            # block == full array dim is always legal
    return int(tmf), int(_cdiv(mf, tmf))


# ----------------------------- wrapper ------------------------------------ #

def linear_block_forward(x, weight, bias, gamma, beta, *,
                         use_bn=True, no_relu=False, eps=1e-5,
                         tmf=None, out_dtype=None):
    """x: (B, N, C_in); weight: (C_out, C_in) like nn.Linear; returns (B, N, C_out)."""
    B, N, C_in = x.shape
    C_out = weight.shape[0]
    M = B * N
    in_dtype = x.dtype
    out_dtype = in_dtype if out_dtype is None else out_dtype
    in_isz = jnp.dtype(in_dtype).itemsize
    out_isz = jnp.dtype(out_dtype).itemsize

    fold = _fold_factor(C_in)
    fw_in, fw_out = fold * C_in, fold * C_out

    x2d = x.reshape(M, C_in)
    m_pad = _cdiv(M, fold) * fold
    mf = m_pad // fold                 # folded rows (incl. possibly 1 partial fold)
    mf_full = M // fold                # fully populated folded rows
    tail = M - mf_full * fold          # 0..fold-1 leftover logical rows

    x_fold = x2d
    if m_pad != M:
        # Only fires when M % fold != 0: pad <= fold-1 rows so the zero-copy
        # (M, C_in) -> (MF, fold*C_in) reshape is legal.  (No tile-size padding.)
        x_fold = jnp.concatenate(
            [x2d, jnp.zeros((m_pad - M, C_in), in_dtype)], axis=0)
    x_fold = x_fold.reshape(mf, fw_in)

    # Block-diagonal weight: one (TMF,128)@(128,256) MXU matmul computes `fold`
    # independent row groups at once (the 7/8 zero blocks are free: HBM-bound op).
    w_f32 = weight.T.astype(jnp.float32)                         # (C_in, C_out)
    w_blk = jnp.kron(jnp.eye(fold, dtype=jnp.float32), w_f32).astype(in_dtype)

    tmf_rows, num_tiles = _pick_fold_tile(mf, fw_in, fw_out, in_isz, out_isz, tmf)

    x_spec = pl.BlockSpec((tmf_rows, fw_in), lambda i: (i, 0))
    w_spec = pl.BlockSpec((fw_in, fw_out), lambda i: (0, 0))     # resident
    vec_spec = pl.BlockSpec((1, fw_out), lambda i: (0, 0))       # resident scale/shift

    flops = 2 * mf * fw_in * fw_out
    x_bytes = mf * fw_in * in_isz
    w_bytes = fw_in * fw_out * in_isz

    if use_bn:
        # -------- phase 1: centered partial statistics (parallel over tiles) ----
        psum, pssq = pl.pallas_call(
            functools.partial(_stats_kernel, mf_full=mf_full),
            out_shape=(jax.ShapeDtypeStruct((num_tiles, 1, fw_out), jnp.float32),
                       jax.ShapeDtypeStruct((num_tiles, 1, fw_out), jnp.float32)),
            grid_spec=pltpu.PrefetchScalarGridSpec(
                num_scalar_prefetch=0,
                grid=(num_tiles,),
                in_specs=[x_spec, w_spec],
                out_specs=(pl.BlockSpec((1, 1, fw_out), lambda i: (i, 0, 0)),
                           pl.BlockSpec((1, 1, fw_out), lambda i: (i, 0, 0)))),
            compiler_params=pltpu.CompilerParams(
                dimension_semantics=("parallel",)),
            cost_estimate=pl.CostEstimate(
                flops=flops + 6 * mf * fw_out,
                transcendentals=0,
                bytes_accessed=x_bytes + w_bytes + 2 * num_tiles * fw_out * 4),
        )(x_fold, w_blk)

        # ---- Chan/Welford combine over (tile, fold-group) chunks: tiny JAX ----
        s_chunks = psum.reshape(num_tiles * fold, C_out)
        ss_chunks = pssq.reshape(num_tiles * fold, C_out)
        n_tiles_valid = jnp.clip(
            mf_full - jnp.arange(num_tiles) * tmf_rows, 0, tmf_rows)
        n_chunks = jnp.repeat(n_tiles_valid, fold).astype(jnp.float32)

        if tail:
            # <= fold-1 leftover logical rows handled in plain JAX (negligible).
            y_tail = x2d[mf_full * fold:M].astype(jnp.float32) @ w_f32  # (tail, C_out)
            s_t = jnp.sum(y_tail, axis=0, keepdims=True)
            ss_t = jnp.sum((y_tail - s_t / tail) ** 2, axis=0, keepdims=True)
            s_chunks = jnp.concatenate([s_chunks, s_t], axis=0)
            ss_chunks = jnp.concatenate([ss_chunks, ss_t], axis=0)
            n_chunks = jnp.concatenate(
                [n_chunks, jnp.full((1,), float(tail), jnp.float32)], axis=0)

        n_col = n_chunks[:, None]
        mean = jnp.sum(s_chunks, axis=0) / M                       # (C_out,)
        mean_c = s_chunks / jnp.maximum(n_col, 1.0)
        m2 = jnp.sum(ss_chunks, axis=0) + jnp.sum(
            n_col * (mean_c - mean) ** 2, axis=0)
        var = jnp.maximum(m2 / M, 0.0)                             # biased (train-mode BN)
        inv_std = jax.lax.rsqrt(var + eps)
        scale = gamma.astype(jnp.float32) * inv_std
        # nn.Linear bias is a per-channel constant -> removed exactly by mean subtraction.
        shift = beta.astype(jnp.float32) - mean * scale
    else:
        scale = jnp.ones((C_out,), jnp.float32)
        shift = bias.astype(jnp.float32)

    scale_f = jnp.tile(scale, fold).reshape(1, fw_out)
    shift_f = jnp.tile(shift, fold).reshape(1, fw_out)

    # ------------- phase 2: apply + activation (parallel over tiles) ----------
    kernel = functools.partial(_apply_kernel, no_relu=no_relu, negative_slope=0.1)
    out_fold = pl.pallas_call(
        kernel,
        out_shape=jax.ShapeDtypeStruct((mf, fw_out), out_dtype),
        grid_spec=pltpu.PrefetchScalarGridSpec(
            num_scalar_prefetch=0,
            grid=(num_tiles,),
            in_specs=[x_spec, w_spec, vec_spec, vec_spec],
            out_specs=pl.BlockSpec((tmf_rows, fw_out), lambda i: (i, 0))),
        compiler_params=pltpu.CompilerParams(
            dimension_semantics=("parallel",)),
        cost_estimate=pl.CostEstimate(
            flops=flops + 4 * mf * fw_out,
            transcendentals=0,
            bytes_accessed=x_bytes + w_bytes + mf * fw_out * out_isz),
    )(x_fold, w_blk, scale_f, shift_f)

    out2d = out_fold.reshape(m_pad, C_out)
    if m_pad != M:
        out2d = out2d[:M]
    return out2d.reshape(B, N, C_out)


# ----------------------------- reference ---------------------------------- #

def _reference(x, weight, bias, gamma, beta, *, use_bn=True, no_relu=False, eps=1e-5):
    B, N, C_in = x.shape
    y = x.astype(jnp.float32).reshape(-1, C_in) @ weight.T + bias
    if use_bn:
        mean = jnp.mean(y, axis=0, keepdims=True)
        var = jnp.mean((y - mean) ** 2, axis=0, keepdims=True)
        y = (y - mean) / jnp.sqrt(var + eps) * gamma + beta
    if not no_relu:
        y = jnp.where(y > 0, y, 0.1 * y)
    return y.reshape(B, N, -1)


if __name__ == "__main__":
    # Module config: LinearBlock(in_dim=16, out_dim=32, use_bn=True, no_relu=False)
    in_dim, out_dim = 16, 32

    key = jax.random.PRNGKey(0)
    kx, kw, kb, kx2, kx3 = jax.random.split(key, 5)

    bound = in_dim ** -0.5
    weight = jax.random.uniform(kw, (out_dim, in_dim), jnp.float32, -bound, bound)
    bias = jax.random.uniform(kb, (out_dim,), jnp.float32, -bound, bound)
    gamma = jnp.ones((out_dim,), jnp.float32)   # BatchNorm1d default weight
    beta = jnp.zeros((out_dim,), jnp.float32)   # BatchNorm1d default bias

    # 1) f32, BN + LeakyReLU, aligned batch (single folded tile).
    x = jax.random.normal(kx, (2, 8, in_dim), dtype=jnp.float32)
    out = jax.block_until_ready(
        linear_block_forward(x, weight, bias, gamma, beta,
                             use_bn=True, no_relu=False))
    ref = _reference(x, weight, bias, gamma, beta, use_bn=True, no_relu=False)
    assert out.shape == (2, 8, out_dim)
    assert jnp.allclose(out, ref, atol=1e-4, rtol=1e-4), "BN mismatch"

    # 2) f32, misaligned M=202: fold padding + ragged multi-tile grid + JAX tail chunk.
    x_odd = jax.random.normal(kx2, (2, 101, in_dim), dtype=jnp.float32)
    out2 = jax.block_until_ready(
        linear_block_forward(x_odd, weight, bias, gamma, beta,
                             use_bn=True, no_relu=False, tmf=8))
    ref2 = _reference(x_odd, weight, bias, gamma, beta, use_bn=True, no_relu=False)
    assert jnp.allclose(out2, ref2, atol=1e-4, rtol=1e-4), "ragged/tiled BN mismatch"

    # 3) f32, no BN (Linear + bias), no_relu=True variant.
    out3 = jax.block_until_ready(
        linear_block_forward(x, weight, bias, gamma, beta,
                             use_bn=False, no_relu=True))
    ref3 = _reference(x, weight, bias, gamma, beta, use_bn=False, no_relu=True)
    assert jnp.allclose(out3, ref3, atol=1e-4, rtol=1e-4), "linear mismatch"

    # 4) bf16 I/O (halves HBM traffic), misaligned M=134, multi-tile (sublane pack 16).
    x3 = jax.random.normal(kx3, (2, 67, in_dim), dtype=jnp.float32)
    out4 = jax.block_until_ready(
        linear_block_forward(x3.astype(jnp.bfloat16), weight, bias, gamma, beta,
                             use_bn=True, no_relu=False, tmf=16))
    ref4 = _reference(x3, weight, bias, gamma, beta, use_bn=True, no_relu=False)
    assert out4.dtype == jnp.bfloat16
    assert jnp.allclose(out4.astype(jnp.float32), ref4, atol=1e-1, rtol=1e-1), \
        "bf16 path mismatch"

    print("KERNEL_OK")
</pallas_src>

<mosaic_0001>
module attributes {stable_mosaic.version = 11 : i64} {
  func.func @_stats_kernel(%arg0: i32, %arg1: memref<2x128xf32, #tpu.memory_space<vmem>>, %arg2: memref<128x256xf32, #tpu.memory_space<vmem>>, %arg3: memref<1x1x256xf32, #tpu.memory_space<vmem>>, %arg4: memref<1x1x256xf32, #tpu.memory_space<vmem>>) attributes {dimension_semantics = [#tpu.dimension_semantics<parallel>], iteration_bounds = array<i64: 1>, scalar_prefetch = 0 : i64, scratch_operands = 0 : i64, tpu.core_type = #tpu.core_type<tc>, window_params = [{transform_indices = @transform_0, window_bounds = array<i64: 2, 128>}, {pipeline_mode = #tpu.pipeline_mode<synchronous>, transform_indices = @transform_1, window_bounds = array<i64: 128, 256>}, {transform_indices = @transform_2, window_bounds = array<i64: 1, 1, 256>}, {transform_indices = @transform_3, window_bounds = array<i64: 1, 1, 256>}]} {
    %c0 = arith.constant 0 : index
    %c0_0 = arith.constant 0 : index
    %0 = vector.load %arg1[%c0, %c0_0] : memref<2x128xf32, #tpu.memory_space<vmem>>, vector<2x128xf32>
    %c0_1 = arith.constant 0 : index
    %c0_2 = arith.constant 0 : index
    %1 = vector.load %arg2[%c0_1, %c0_2] : memref<128x256xf32, #tpu.memory_space<vmem>>, vector<128x256xf32>
    %cst = arith.constant dense<0.000000e+00> : vector<2x256xf32>
    %2 = tpu.matmul %0, %1, %cst {dimension_numbers = #tpu.dot_dimension_numbers<[1], [0], [0], [1], [0, 0, 1, 1], [], []>} : vector<2x128xf32>, vector<128x256xf32>, vector<2x256xf32> -> vector<2x256xf32>
    %c2_i32 = arith.constant 2 : i32
    %3 = arith.muli %arg0, %c2_i32 : i32
    %4 = tpu.iota {dimensions = array<i32: 0>} : vector<2x256xi32>
    %5 = vector.broadcast %3 : i32 to vector<2x256xi32>
    %6 = arith.addi %4, %5 : vector<2x256xi32>
    %c2_i32_3 = arith.constant 2 : i32
    %7 = vector.broadcast %c2_i32_3 : i32 to vector<2x256xi32>
    %8 = arith.cmpi slt, %6, %7 : vector<2x256xi32>
    %c2_i32_4 = arith.constant 2 : i32
    %9 = arith.subi %c2_i32_4, %3 : i32
    %c0_i32 = arith.constant 0 : i32
    %c2_i32_5 = arith.constant 2 : i32
    %10 = arith.maxsi %c0_i32, %9 : i32
    %11 = arith.minsi %c2_i32_5, %10 : i32
    %12 = arith.sitofp %11 : i32 to f32
    %cst_6 = arith.constant 0.000000e+00 : f32
    %13 = vector.broadcast %cst_6 : f32 to vector<2x256xf32>
    %14 = arith.select %8, %2, %13 : vector<2x256xi1>, vector<2x256xf32>
    %cst_7 = arith.constant dense<0.000000e+00> : vector<256xf32>
    %15 = vector.multi_reduction <add>, %14, %cst_7 [0] : vector<2x256xf32> to vector<256xf32>
    %16 = vector.shape_cast %15 : vector<256xf32> to vector<1x256xf32>
    %cst_8 = arith.constant 1.000000e+00 : f32
    %17 = arith.maximumf %12, %cst_8 : f32
    %18 = vector.broadcast %17 : f32 to vector<1x256xf32>
    %19 = arith.divf %16, %18 : vector<1x256xf32>
    %20 = vector.broadcast %19 : vector<1x256xf32> to vector<2x256xf32>
    %21 = arith.subf %2, %20 : vector<2x256xf32>
    %cst_9 = arith.constant 0.000000e+00 : f32
    %22 = vector.broadcast %cst_9 : f32 to vector<2x256xf32>
    %23 = arith.select %8, %21, %22 : vector<2x256xi1>, vector<2x256xf32>
    %24 = arith.mulf %23, %23 : vector<2x256xf32>
    %cst_10 = arith.constant dense<0.000000e+00> : vector<256xf32>
    %25 = vector.multi_reduction <add>, %24, %cst_10 [0] : vector<2x256xf32> to vector<256xf32>
    %26 = vector.shape_cast %25 : vector<256xf32> to vector<1x256xf32>
    %27 = vector.shape_cast %16 : vector<1x256xf32> to vector<1x1x256xf32>
    %c0_11 = arith.constant 0 : index
    %c0_12 = arith.constant 0 : index
    %c0_13 = arith.constant 0 : index
    %28 = vector.load %arg3[%c0_11, %c0_12, %c0_13] : memref<1x1x256xf32, #tpu.memory_space<vmem>>, vector<1x1x256xf32>
    tpu.vector_store %arg3[%c0_11, %c0_12, %c0_13], %27 {strides = array<i32>} : memref<1x1x256xf32, #tpu.memory_space<vmem>>, vector<1x1x256xf32>,
    %29 = vector.shape_cast %26 : vector<1x256xf32> to vector<1x1x256xf32>
    %c0_14 = arith.constant 0 : index
    %c0_15 = arith.constant 0 : index
    %c0_16 = arith.constant 0 : index
    %30 = vector.load %arg4[%c0_14, %c0_15, %c0_16] : memref<1x1x256xf32, #tpu.memory_space<vmem>>, vector<1x1x256xf32>
    tpu.vector_store %arg4[%c0_14, %c0_15, %c0_16], %29 {strides = array<i32>} : memref<1x1x256xf32, #tpu.memory_space<vmem>>, vector<1x1x256xf32>,
    return
  }
  func.func @transform_0(%arg0: i32) -> (i32, i32) {
    %c0_i32 = arith.constant 0 : i32
    %c0_i32_0 = arith.constant 0 : i32
    return %arg0, %c0_i32 : i32, i32
  }
  func.func @transform_1(%arg0: i32) -> (i32, i32) {
    %c0_i32 = arith.constant 0 : i32
    %c0_i32_0 = arith.constant 0 : i32
    %c0_i32_1 = arith.constant 0 : i32
    return %c0_i32, %c0_i32_0 : i32, i32
  }
  func.func @transform_2(%arg0: i32) -> (i32, i32, i32) {
    %c0_i32 = arith.constant 0 : i32
    %c0_i32_0 = arith.constant 0 : i32
    %c0_i32_1 = arith.constant 0 : i32
    return %arg0, %c0_i32, %c0_i32_0 : i32, i32, i32
  }
  func.func @transform_3(%arg0: i32) -> (i32, i32, i32) {
    %c0_i32 = arith.constant 0 : i32
    %c0_i32_0 = arith.constant 0 : i32
    %c0_i32_1 = arith.constant 0 : i32
    return %arg0, %c0_i32, %c0_i32_0 : i32, i32, i32
  }
}

</mosaic_0001>

<llo_original>
// kernel: tpu_custom_call.1
$region0: #{tpu_custom_call.1}
  #allocation0 [shape = 'u32[]', space=smem, size = 0x4, offset = 0x4, fixed_abs, tag = 'smem constant byte address 0x4 - core index']
  #allocation1 [shape = 'u32[144,128]{1,0:T(1,128)}', space=vmem, size = 0x12000, scoped, tag = 'internal scratch']
  %s0 = inlined_call_operand.hbm [shape: f32[2,128], index: 0, kind: input, shape index: {}]
  %s1 = inlined_call_operand.hbm [shape: f32[128,256], index: 1, kind: input, shape index: {}]
  %s2 = inlined_call_operand.hbm [shape: f32[1,1,256], index: 2, kind: output, shape index: {0}]
  %s3 = inlined_call_operand.hbm [shape: f32[1,1,256], index: 3, kind: output, shape index: {1}]
  %4 = xla_tuple %s2, %s3
  %s5 = sld [smem:[#allocation0]]
  $region34: #{tpu_custom_call.1} parent=0
    _
  %s7 = ssub.s32 1, %s5
  %s8 = scalar_select 0, %s7, %s5
  $region1: #{tpu_custom_call.1} parent=0
    #allocation2 [shape = 'u8[1024]{0}', space=vmem, size = 0x400, scoped, tag = 'input window, operand 0, single buffered']
    #allocation3 [shape = 's32[1]{0}', space=sflag, size = 0x4, scoped, tag = 'scoped memory for tpu_custom_call.1']
    #allocation4 [shape = 's32[1]{0}', space=sflag, size = 0x4, scoped, tag = 'scoped memory for tpu_custom_call.1']
    #allocation5 [shape = 'u8[131072]{0}', space=vmem, size = 0x20000, scoped, tag = 'input window, operand 1, single buffered']
    #allocation6 [shape = 's32[1]{0}', space=sflag, size = 0x4, scoped, tag = 'scoped memory for tpu_custom_call.1']
    #allocation7 [shape = 'u8[1024]{0}', space=vmem, size = 0x400, scoped, tag = 'output window, operand 0, single buffered']
    #allocation8 [shape = 'u8[1024]{0}', space=vmem, size = 0x400, scoped, tag = 'output window, operand 1, single buffered']
    #allocation9 [shape = 's32[1]{0}', space=sflag, size = 0x4, scoped, tag = 'scoped memory for tpu_custom_call.1']
    %9 = vsyncpa [#allocation3], 0
    %10 = vsyncpa [#allocation6], 0
    %11 = vsyncpa [#allocation4], 0
    %12 = vsyncpa [#allocation9], 0
    // Predicated region
    $region2: #{tpu_custom_call.1} parent=1 // pred_check
      _
    $region3: #{tpu_custom_call.1} parent=1 // pred_check_branch
      %14 = sbr.rel (0) target = $region5
    $region4: #{tpu_custom_call.1} parent=1 // pred_region
      %s16 = ssub.s32 32, 32
      %17 = vsyncadd [#allocation3], %s16
      %s19 = sshll.u32 [#allocation2], 4
      %s20 = int_to_ptr.vmem [resolvable:$true] %s19
      %22 = dma.hbm_to_vmem [thread:$0]  %s0, 32, %s20, [#allocation3]
    $region5: #{tpu_custom_call.1} parent=1 // pred_fallthru
      _
    // Predicated region
    $region6: #{tpu_custom_call.1} parent=1 // pred_check
      _
    $region7: #{tpu_custom_call.1} parent=1 // pred_check_branch
      %24 = sbr.rel (0) target = $region9
    $region8: #{tpu_custom_call.1} parent=1 // pred_region
      %s26 = ssub.s32 4096, 4096
      %27 = vsyncadd [#allocation6], %s26
      %s28 = sshll.u32 [#allocation5], 4
      %s29 = int_to_ptr.vmem [resolvable:$true] %s28
      %34 = dma.hbm_to_vmem [thread:$0]  %s1, 4096, %s29, [#allocation6], 256, 256, 16
    $region9: #{tpu_custom_call.1} parent=1 // pred_fallthru
      _
    // Predicated region
    $region10: #{tpu_custom_call.1} parent=1 // pred_check
      _
    $region11: #{tpu_custom_call.1} parent=1 // pred_check_branch
      %36 = sbr.rel (0) target = $region13
    $region12: #{tpu_custom_call.1} parent=1 // pred_region
      %37 = dma.done [#allocation3], 32
    $region13: #{tpu_custom_call.1} parent=1 // pred_fallthru
      _
    // Predicated region
    $region14: #{tpu_custom_call.1} parent=1 // pred_check
      _
    $region15: #{tpu_custom_call.1} parent=1 // pred_check_branch
      %39 = sbr.rel (0) target = $region17
    $region16: #{tpu_custom_call.1} parent=1 // pred_region
      %40 = dma.done [#allocation6], 4096
    $region17: #{tpu_custom_call.1} parent=1 // pred_fallthru
      _
    %v41 = vld [vmem:[#allocation2] sm:$0x3]
    %v42 = vld [vmem:[#allocation5] sm:$0xff]
    %v43 = vld [vmem:[#allocation5 + $0x8] sm:$0xff]
    %v44 = vld [vmem:[#allocation5 + $0x10] sm:$0xff]
    %v45 = vld [vmem:[#allocation5 + $0x18] sm:$0xff]
    %v46 = vld [vmem:[#allocation5 + $0x20] sm:$0xff]
    %v47 = vld [vmem:[#allocation5 + $0x28] sm:$0xff]
    %v48 = vld [vmem:[#allocation5 + $0x30] sm:$0xff]
    %v49 = vld [vmem:[#allocation5 + $0x38] sm:$0xff]
    %v50 = vld [vmem:[#allocation5 + $0x40] sm:$0xff]
    %v51 = vld [vmem:[#allocation5 + $0x48] sm:$0xff]
    %v52 = vld [vmem:[#allocation5 + $0x50] sm:$0xff]
    %v53 = vld [vmem:[#allocation5 + $0x58] sm:$0xff]
    %v54 = vld [vmem:[#allocation5 + $0x60] sm:$0xff]
    %v55 = vld [vmem:[#allocation5 + $0x68] sm:$0xff]
    %v56 = vld [vmem:[#allocation5 + $0x70] sm:$0xff]
    %v57 = vld [vmem:[#allocation5 + $0x78] sm:$0xff]
    %v58 = vld [vmem:[#allocation5 + $0x80] sm:$0xff]
    %v59 = vld [vmem:[#allocation5 + $0x88] sm:$0xff]
    %v60 = vld [vmem:[#allocation5 + $0x90] sm:$0xff]
    %v61 = vld [vmem:[#allocation5 + $0x98] sm:$0xff]
    %v62 = vld [vmem:[#allocation5 + $0xa0] sm:$0xff]
    %v63 = vld [vmem:[#allocation5 + $0xa8] sm:$0xff]
    %v64 = vld [vmem:[#allocation5 + $0xb0] sm:$0xff]
    %v65 = vld [vmem:[#allocation5 + $0xb8] sm:$0xff]
    %v66 = vld [vmem:[#allocation5 + $0xc0] sm:$0xff]
    %v67 = vld [vmem:[#allocation5 + $0xc8] sm:$0xff]
    %v68 = vld [vmem:[#allocation5 + $0xd0] sm:$0xff]
    %v69 = vld [vmem:[#allocation5 + $0xd8] sm:$0xff]
    %v70 = vld [vmem:[#allocation5 + $0xe0] sm:$0xff]
    %v71 = vld [vmem:[#allocation5 + $0xe8] sm:$0xff]
    %v72 = vld [vmem:[#allocation5 + $0xf0] sm:$0xff]
    %v73 = vld [vmem:[#allocation5 + $0xf8] sm:$0xff]
    %74 = vmatprep.subr.mxu0 %v73
    %75 = vmatpush1.msra.mxu0 %v72
    %76 = vmatprep.subr.mxu0 %v71
    %77 = vmatpush1.msra.mxu0 %v70
    %78 = vmatprep.subr.mxu0 %v69
    %79 = vmatpush1.msra.mxu0 %v68
    %80 = vmatprep.subr.mxu0 %v67
    %81 = vmatpush1.msra.mxu0 %v66
    %82 = vmatprep.subr.mxu0 %v65
    %83 = vmatpush1.msra.mxu0 %v64
    %84 = vmatprep.subr.mxu0 %v63
    %85 = vmatpush1.msra.mxu0 %v62
    %86 = vmatprep.subr.mxu0 %v61
    %87 = vmatpush1.msra.mxu0 %v60
    %88 = vmatprep.subr.mxu0 %v59
    %89 = vmatpush1.msra.mxu0 %v58
    %90 = vmatprep.subr.mxu0 %v57
    %91 = vmatpush1.msra.mxu0 %v56
    %92 = vmatprep.subr.mxu0 %v55
    %93 = vmatpush1.msra.mxu0 %v54
    %94 = vmatprep.subr.mxu0 %v53
    %95 = vmatpush1.msra.mxu0 %v52
    %96 = vmatprep.subr.mxu0 %v51
    %97 = vmatpush1.msra.mxu0 %v50
    %98 = vmatprep.subr.mxu0 %v49
    %99 = vmatpush1.msra.mxu0 %v48
    %100 = vmatprep.subr.mxu0 %v47
    %101 = vmatpush1.msra.mxu0 %v46
    %102 = vmatprep.subr.mxu0 %v45
    %103 = vmatpush1.msra.mxu0 %v44
    %104 = vmatprep.subr.mxu0 %v43
    %105 = vmatpush1.msra.mxu0 %v42
    %106 = vmatprep.subr.mxu0 0.0
    %107 = vmatpush2.msra.mxu0 0.0
    %108 = vmatprep.subr.mxu0 0.0
    %109 = vmatpush2.msra.mxu0 0.0
    %110 = vmatprep.subr.mxu0 0.0
    %111 = vmatpush2.msra.mxu0 0.0
    %112 = vmatprep.subr.mxu0 0.0
    %113 = vmatpush2.msra.mxu0 0.0
    %114 = vmatprep.subr.mxu0 0.0
    %115 = vmatpush2.msra.mxu0 0.0
    %116 = vmatprep.subr.mxu0 0.0
    %117 = vmatpush2.msra.mxu0 0.0
    %118 = vmatprep.subr.mxu0 0.0
    %119 = vmatpush2.msra.mxu0 0.0
    %120 = vmatprep.subr.mxu0 0.0
    %121 = vmatpush2.msra.mxu0 0.0
    %122 = vmatprep.subr.mxu0 0.0
    %123 = vmatpush2.msra.mxu0 0.0
    %124 = vmatprep.subr.mxu0 0.0
    %125 = vmatpush2.msra.mxu0 0.0
    %126 = vmatprep.subr.mxu0 0.0
    %127 = vmatpush2.msra.mxu0 0.0
    %128 = vmatprep.subr.mxu0 0.0
    %129 = vmatpush2.msra.mxu0 0.0
    %130 = vmatprep.subr.mxu0 0.0
    %131 = vmatpush2.msra.mxu0 0.0
    %132 = vmatprep.subr.mxu0 0.0
    %133 = vmatpush2.msra.mxu0 0.0
    %134 = vmatprep.subr.mxu0 0.0
    %135 = vmatpush2.msra.mxu0 0.0
    %136 = vmatprep.subr.mxu0 0.0
    %137 = vmatpush2.msra.mxu0 0.0
    %138 = vmatprep.mubr.f32.mxu0 0.0
    %139 = vmatmul.mubr.f32.gmra.mxu0 %v41
    %v140 = vpop.f32.mrf.mxu0
    %v141 = vadd.f32 0.0, %v140
    %v142 = vpop.f32.mrf.mxu0
    %v143 = vadd.f32 0.0, %v142
    %144 = vdwg.mxu0
    %s145 = smul.u32 0, 2
    %v146 = vlaneseq
    %v147 = vshrl.u32 %v146, 7
    %v148 = vstv %s145
    %v149 = vadd.s32 %v147, %v148
    %vm150 = vcmp.lt.s32.totalorder %v149, 2
    %s151 = ssub.s32 2, %s145
    %p152 = scmp.gt.s32.totalorder %s151, 0
    %s153 = scalar_select %p152, %s151, 0
    %p154 = scmp.lt.s32.totalorder %s153, 2
    %s155 = scalar_select %p154, %s153, 2
    %s156 = scvt.s32.f32 %s155
    %v157 = vsel %vm150, %v141, 0.0
    %v158 = vsel %vm150, %v143, 0.0
    %vm159 = vcmask 1041408
    %v160 = vsel %vm159, %v157, 0.0
    %v161 = vrot.slane %v160, 4
    %v162 = vadd.f32 %v160, %v161
    %v163 = vrot.slane %v162, 2
    %v164 = vadd.f32 %v162, %v163
    %v165 = vrot.slane %v164, 1
    %v166 = vadd.f32 %v164, %v165
    %v167 = vsel %vm159, %v158, 0.0
    %v168 = vrot.slane %v167, 4
    %v169 = vadd.f32 %v167, %v168
    %v170 = vrot.slane %v169, 2
    %v171 = vadd.f32 %v169, %v170
    %v172 = vrot.slane %v171, 1
    %v173 = vadd.f32 %v171, %v172
    %s174 = smax.f32 %s156, 1.0
    %v175 = vstv %s174
    %v176 = vrcp.pop %v175
    %v177 = vmul.f32 %v166, %v176
    %v178 = vmul.f32 %v173, %v176
    %v179 = vsub.f32 %v141, %v177
    %v180 = vsub.f32 %v143, %v178
    %v181 = vsel %vm150, %v179, 0.0
    %v182 = vsel %vm150, %v180, 0.0
    %v183 = vmul.f32 %v181, %v181
    %v184 = vmul.f32 %v182, %v182
    %v185 = vsel %vm159, %v183, 0.0
    %v186 = vrot.slane %v185, 4
    %v187 = vadd.f32 %v185, %v186
    %v188 = vrot.slane %v187, 2
    %v189 = vadd.f32 %v187, %v188
    %v190 = vrot.slane %v189, 1
    %v191 = vadd.f32 %v189, %v190
    %v192 = vsel %vm159, %v184, 0.0
    %v193 = vrot.slane %v192, 4
    %v194 = vadd.f32 %v192, %v193
    %v195 = vrot.slane %v194, 2
    %v196 = vadd.f32 %v194, %v195
    %v197 = vrot.slane %v196, 1
    %v198 = vadd.f32 %v196, %v197
    %v201 = vcombine.low %v166, %v173
    %v203 = vunpack.c.l.s4 1966171168
    %v204 = vunpack.c.0.s8 %v203
    %v205 = vlaneseq
    %v206 = vshrl.u32 %v205, 7
    %v207 = vsub.s32 %v204, %v206
    %v208 = vrot.slane %v201, %v207
    %v210 = vunpack.c.l.s4 1966171168
    %v211 = vunpack.c.0.s8 %v210
    %v212 = vlaneseq
    %v213 = vshrl.u32 %v212, 7
    %v214 = vsub.s32 %v211, %v213
    %v215 = vrot.slane %v208, %v214
    %v217 = vlaneseq
    %vm218 = vcmp.ge.s32.totalorder %v217, 0
    %vm219 = vcmp.lt.s32.totalorder %v217, 256
    %vm220 = vmand %vm218, %vm219
    %221 = vst.msk [vmem:[#allocation7] sm:$0x3] %vm220, %v215
    %v224 = vcombine.low %v191, %v198
    %v226 = vunpack.c.l.s4 1966171168
    %v227 = vunpack.c.0.s8 %v226
    %v228 = vlaneseq
    %v229 = vshrl.u32 %v228, 7
    %v230 = vsub.s32 %v227, %v229
    %v231 = vrot.slane %v224, %v230
    %v233 = vunpack.c.l.s4 1966171168
    %v234 = vunpack.c.0.s8 %v233
    %v235 = vlaneseq
    %v236 = vshrl.u32 %v235, 7
    %v237 = vsub.s32 %v234, %v236
    %v238 = vrot.slane %v231, %v237
    %240 = vst.msk [vmem:[#allocation8] sm:$0x3] %vm220, %v238
    // Predicated region
    $region18: #{tpu_custom_call.1} parent=1 // pred_check
      _
    $region19: #{tpu_custom_call.1} parent=1 // pred_check_branch
      %242 = sbr.rel (0) target = $region21
    $region20: #{tpu_custom_call.1} parent=1 // pred_region
      %s244 = ssub.s32 32, 32
      %245 = vsyncadd [#allocation4], %s244
      %s247 = sshll.u32 [#allocation7], 4
      %s248 = int_to_ptr.vmem [resolvable:$true] %s247
      %250 = dma.vmem_to_hbm [thread:$0]  %s248, 32, %s2, [#allocation4]
    $region21: #{tpu_custom_call.1} parent=1 // pred_fallthru
      _
    // Predicated region
    $region22: #{tpu_custom_call.1} parent=1 // pred_check
      _
    $region23: #{tpu_custom_call.1} parent=1 // pred_check_branch
      %252 = sbr.rel (0) target = $region25
    $region24: #{tpu_custom_call.1} parent=1 // pred_region
      %s254 = ssub.s32 32, 32
      %255 = vsyncadd [#allocation9], %s254
      %s257 = sshll.u32 [#allocation8], 4
      %s258 = int_to_ptr.vmem [resolvable:$true] %s257
      %260 = dma.vmem_to_hbm [thread:$0]  %s258, 32, %s3, [#allocation9]
    $region25: #{tpu_custom_call.1} parent=1 // pred_fallthru
      _
    // Predicated region
    $region26: #{tpu_custom_call.1} parent=1 // pred_check
      _
    $region27: #{tpu_custom_call.1} parent=1 // pred_check_branch
      %262 = sbr.rel (0) target = $region29
    $region28: #{tpu_custom_call.1} parent=1 // pred_region
      %263 = dma.done [#allocation4], 32
    $region29: #{tpu_custom_call.1} parent=1 // pred_fallthru
      _
    // Predicated region
    $region30: #{tpu_custom_call.1} parent=1 // pred_check
      _
    $region31: #{tpu_custom_call.1} parent=1 // pred_check_branch
      %265 = sbr.rel (0) target = $region33
    $region32: #{tpu_custom_call.1} parent=1 // pred_region
      %266 = dma.done [#allocation9], 32
    $region33: #{tpu_custom_call.1} parent=1 // pred_fallthru
      _
    %267 = vsyncpa [#allocation3], 1
    %268 = vsyncpa [#allocation6], 1
    %269 = vsyncpa [#allocation4], 1
    %270 = vsyncpa [#allocation9], 1

</llo_original>
